<compile_context>
chip_gen: v7x
topology: tpu7x:2x2x1
jax: 0.10.0
libtpu: 0.0.40
codegen_flags: <defaults>
</compile_context>

<pallas_src>
import jax
import jax.numpy as jnp
from jax.experimental import pallas as pl
from jax.experimental.pallas import tpu as pltpu


def _pick_tile(total, cap, align):
    """Largest multiple of `align` dividing `total` and <= cap; else `total`."""
    if total <= cap:
        return total
    best = None
    t = align
    while t <= cap:
        if total % t == 0:
            best = t
        t += align
    return best if best is not None else total


# ----------------------------------------------------------------------------
# Kernel A: V projection (1x1 conv) as a weight-stationary channel matmul,
# tiled over (batch, lane-dense HW chunks).
# refs: x (C, T_HW), Wv (C, C), bv (C, 1) -> v (C, T_HW)
# ----------------------------------------------------------------------------
def vproj_kernel(x_ref, wv_ref, bv_ref, v_ref):
    v_ref[...] = (
        jnp.dot(wv_ref[...], x_ref[...], preferred_element_type=jnp.float32)
        + bv_ref[...]
    )


# ----------------------------------------------------------------------------
# Kernel B: diagonal energy + softmax, computed directly from diag(x).
#   qd_b = Wq @ xd_b + bq ; kd_b = Wk @ xd_b + bk ; E = sum_b qd_b^T kd_b
#   S' = gamma * softmax(E, axis=-1)
# refs: gamma (1,1) SMEM, xd (B, C, D), Wq/Wk (C, C), bq/bk (C, 1) -> s (D, D)
# ----------------------------------------------------------------------------
def energy_softmax_kernel(gamma_ref, xd_ref, wq_ref, wk_ref, bq_ref, bk_ref, s_ref):
    wq = wq_ref[...]
    wk = wk_ref[...]
    bq = bq_ref[...]
    bk = bk_ref[...]
    B = xd_ref.shape[0]
    D = s_ref.shape[0]

    e = jnp.zeros((D, D), jnp.float32)
    for b in range(B):  # B is small & static; unrolled tiny matmuls
        xb = xd_ref[b]  # (C, D)
        qd = jnp.dot(wq, xb, preferred_element_type=jnp.float32) + bq  # (C, D)
        kd = jnp.dot(wk, xb, preferred_element_type=jnp.float32) + bk  # (C, D)
        # E[i, j] += sum_c qd[c, i] * kd[c, j]
        e = e + jax.lax.dot_general(
            qd, kd, (((0,), (0,)), ((), ())), preferred_element_type=jnp.float32
        )

    m = jnp.max(e, axis=-1, keepdims=True)
    p = jnp.exp(e - m)
    denom = jnp.sum(p, axis=-1, keepdims=True)
    # One-shot (D, D) epilogue: exact reciprocal keeps the 1e-5 check tight
    # (approx=True would route to the EUP but adds ~1e-3 relative error).
    inv = pl.reciprocal(denom, approx=False)
    s_ref[...] = (gamma_ref[0, 0] * p) * inv  # gamma folded into S once


# ----------------------------------------------------------------------------
# Kernel C: batched apply + residual. Rows are flattened (b, c, h); S' stays
# resident in VMEM (same block every grid step).
# refs: s (D, D), v (TILE_M, W), x (TILE_M, W) -> o (TILE_M, D)
# ----------------------------------------------------------------------------
def apply_kernel(s_ref, v_ref, x_ref, o_ref):
    # o[m, j] = sum_w v[m, w] * s[j, w]   (= V @ S'^T, gamma already in s)
    o = jax.lax.dot_general(
        v_ref[...], s_ref[...], (((1,), (1,)), ((), ())),
        preferred_element_type=jnp.float32,
    )
    o_ref[...] = o + x_ref[...]


def dattention_forward(x, Wq, bq, Wk, bk, Wv, bv, gamma):
    B, C, H, W = x.shape
    assert H == W, "diagonal attention requires square spatial dims"
    HW = H * W
    BC = B * C
    D = H

    x2 = x.reshape(B, C, HW)
    xd = jnp.diagonal(x, axis1=2, axis2=3)  # (B, C, D) — cheap strided gather
    gamma_arr = jnp.asarray(gamma, dtype=jnp.float32).reshape(1, 1)

    # --- Kernel B: S' = gamma * softmax(diag(q)^T @ diag(k)) --------------
    s_scaled = pl.pallas_call(
        energy_softmax_kernel,
        grid=(1,),
        in_specs=[
            pl.BlockSpec((1, 1), lambda i: (0, 0),
                         memory_space=pltpu.MemorySpace.SMEM),
            pl.BlockSpec((B, C, D), lambda i: (0, 0, 0)),
            pl.BlockSpec((C, C), lambda i: (0, 0)),
            pl.BlockSpec((C, C), lambda i: (0, 0)),
            pl.BlockSpec((C, 1), lambda i: (0, 0)),
            pl.BlockSpec((C, 1), lambda i: (0, 0)),
        ],
        out_specs=pl.BlockSpec((D, D), lambda i: (0, 0)),
        out_shape=jax.ShapeDtypeStruct((D, D), jnp.float32),
        compiler_params=pltpu.CompilerParams(dimension_semantics=("arbitrary",)),
        cost_estimate=pl.CostEstimate(
            flops=int(B * (4 * C * C * D + 2 * C * D * D) + 5 * D * D),
            transcendentals=int(D * D),
            bytes_accessed=int(4 * (B * C * D + 2 * C * C + 2 * C + D * D)),
        ),
    )(gamma_arr, xd, Wq, Wk, bq.reshape(C, 1), bk.reshape(C, 1))

    # --- Kernel A: V projection (weight-stationary, HW-tiled) -------------
    t_hw_cap = max(128, (2 * 1024 * 1024) // (4 * C))  # keep x/v blocks modest
    T_HW = _pick_tile(HW, t_hw_cap, 128)
    v2 = pl.pallas_call(
        vproj_kernel,
        grid=(B, HW // T_HW),
        in_specs=[
            pl.BlockSpec((None, C, T_HW), lambda b, t: (b, 0, t)),
            pl.BlockSpec((C, C), lambda b, t: (0, 0)),
            pl.BlockSpec((C, 1), lambda b, t: (0, 0)),
        ],
        out_specs=pl.BlockSpec((None, C, T_HW), lambda b, t: (b, 0, t)),
        out_shape=jax.ShapeDtypeStruct((B, C, HW), jnp.float32),
        compiler_params=pltpu.CompilerParams(
            dimension_semantics=("parallel", "parallel")),
        cost_estimate=pl.CostEstimate(
            flops=int(2 * B * C * C * HW + B * C * HW),
            transcendentals=0,
            bytes_accessed=int(4 * (2 * B * C * HW + C * C + C)),
        ),
    )(x2, Wv, bv.reshape(C, 1))

    # --- Kernel C: y = V @ S'^T + x, batched over (b, c, h) rows -----------
    M = BC * H
    vrows = v2.reshape(M, W)
    xrows = x.reshape(M, W)
    TILE_M = _pick_tile(M, 1024, 8)
    yrows = pl.pallas_call(
        apply_kernel,
        grid=(M // TILE_M,),
        in_specs=[
            pl.BlockSpec((D, D), lambda m: (0, 0)),        # S' resident
            pl.BlockSpec((TILE_M, W), lambda m: (m, 0)),
            pl.BlockSpec((TILE_M, W), lambda m: (m, 0)),
        ],
        out_specs=pl.BlockSpec((TILE_M, D), lambda m: (m, 0)),
        out_shape=jax.ShapeDtypeStruct((M, D), jnp.float32),
        compiler_params=pltpu.CompilerParams(dimension_semantics=("parallel",)),
        cost_estimate=pl.CostEstimate(
            flops=int(2 * M * W * D + M * D),
            transcendentals=0,
            bytes_accessed=int(4 * (2 * M * W + M * D + D * D)),
        ),
    )(s_scaled, vrows, xrows)

    return yrows.reshape(B, C, H, W)


# ----------------------------------------------------------------------------
# Pure-JAX reference (mirrors the PyTorch forward exactly).
# ----------------------------------------------------------------------------
def ref_forward(x, Wq, bq, Wk, bk, Wv, bv, gamma):
    B, C, H, W = x.shape
    q = jnp.einsum('oc,bchw->bohw', Wq, x) + bq[None, :, None, None]
    k = jnp.einsum('oc,bchw->bohw', Wk, x) + bk[None, :, None, None]
    v = jnp.einsum('oc,bchw->bohw', Wv, x) + bv[None, :, None, None]
    q3 = q.reshape(B * C, H, W)
    k3 = k.reshape(B * C, H, W)
    v3 = v.reshape(B * C, H, W)
    qd = jnp.diagonal(q3, axis1=1, axis2=2)          # (BC, D)
    kd = jnp.diagonal(k3, axis1=1, axis2=2)          # (BC, D)
    e = qd.T @ kd                                    # (D, D)
    s = jax.nn.softmax(e, axis=-1)
    out = jnp.einsum('nhw,jw->nhj', v3, s)           # V @ S^T
    return gamma * out.reshape(x.shape) + x


if __name__ == "__main__":
    B, C, H, W = 2, 4, 16, 16
    key = jax.random.PRNGKey(0)
    kx, kq, kk, kv, kbq, kbk, kbv = jax.random.split(key, 7)

    x = jax.random.normal(kx, (B, C, H, W), dtype=jnp.float32)
    # Conv2d(in_dim, in_dim, kernel_size=1) weights -> (C, C); biases -> (C,)
    Wq = jax.random.normal(kq, (C, C), dtype=jnp.float32) * 0.1
    Wk = jax.random.normal(kk, (C, C), dtype=jnp.float32) * 0.1
    Wv = jax.random.normal(kv, (C, C), dtype=jnp.float32) * 0.1
    bq = jax.random.normal(kbq, (C,), dtype=jnp.float32) * 0.1
    bk = jax.random.normal(kbk, (C,), dtype=jnp.float32) * 0.1
    bv = jax.random.normal(kbv, (C,), dtype=jnp.float32) * 0.1
    # PyTorch inits gamma = 0 (output == x); use a nonzero deterministic value
    # so the attention path is actually exercised.
    gamma = 0.5

    y = dattention_forward(x, Wq, bq, Wk, bk, Wv, bv, gamma)
    y = jax.block_until_ready(y)

    y_ref = ref_forward(x, Wq, bq, Wk, bk, Wv, bv, gamma)
    assert y.shape == x.shape
    assert jnp.allclose(y, y_ref, rtol=1e-5, atol=1e-5), float(jnp.max(jnp.abs(y - y_ref)))

    print("KERNEL_OK")
</pallas_src>

<mosaic_0001>
module attributes {stable_mosaic.version = 11 : i64} {
  func.func @energy_softmax_kernel(%arg0: i32, %arg1: memref<1x1xf32, #tpu.memory_space<smem>>, %arg2: memref<2x4x16xf32, #tpu.memory_space<vmem>>, %arg3: memref<4x4xf32, #tpu.memory_space<vmem>>, %arg4: memref<4x4xf32, #tpu.memory_space<vmem>>, %arg5: memref<4x1xf32, #tpu.memory_space<vmem>>, %arg6: memref<4x1xf32, #tpu.memory_space<vmem>>, %arg7: memref<16x16xf32, #tpu.memory_space<vmem>>) attributes {dimension_semantics = [#tpu.dimension_semantics<arbitrary>], iteration_bounds = array<i64: 1>, scalar_prefetch = 0 : i64, scratch_operands = 0 : i64, tpu.core_type = #tpu.core_type<tc>, window_params = [{transform_indices = @transform_0, window_bounds = array<i64: 1, 1>}, {pipeline_mode = #tpu.pipeline_mode<synchronous>, transform_indices = @transform_1, window_bounds = array<i64: 2, 4, 16>}, {pipeline_mode = #tpu.pipeline_mode<synchronous>, transform_indices = @transform_2, window_bounds = array<i64: 4, 4>}, {pipeline_mode = #tpu.pipeline_mode<synchronous>, transform_indices = @transform_3, window_bounds = array<i64: 4, 4>}, {pipeline_mode = #tpu.pipeline_mode<synchronous>, transform_indices = @transform_4, window_bounds = array<i64: 4, 1>}, {pipeline_mode = #tpu.pipeline_mode<synchronous>, transform_indices = @transform_5, window_bounds = array<i64: 4, 1>}, {pipeline_mode = #tpu.pipeline_mode<synchronous>, transform_indices = @transform_6, window_bounds = array<i64: 16, 16>}]} {
    %c0 = arith.constant 0 : index
    %c0_0 = arith.constant 0 : index
    %0 = vector.load %arg3[%c0, %c0_0] : memref<4x4xf32, #tpu.memory_space<vmem>>, vector<4x4xf32>
    %c0_1 = arith.constant 0 : index
    %c0_2 = arith.constant 0 : index
    %1 = vector.load %arg4[%c0_1, %c0_2] : memref<4x4xf32, #tpu.memory_space<vmem>>, vector<4x4xf32>
    %c0_3 = arith.constant 0 : index
    %c0_4 = arith.constant 0 : index
    %2 = vector.load %arg5[%c0_3, %c0_4] : memref<4x1xf32, #tpu.memory_space<vmem>>, vector<4x1xf32>
    %c0_5 = arith.constant 0 : index
    %c0_6 = arith.constant 0 : index
    %3 = vector.load %arg6[%c0_5, %c0_6] : memref<4x1xf32, #tpu.memory_space<vmem>>, vector<4x1xf32>
    %cst = arith.constant 0.000000e+00 : f32
    %4 = vector.broadcast %cst : f32 to vector<16x16xf32>
    %c0_7 = arith.constant 0 : index
    %c0_8 = arith.constant 0 : index
    %c0_9 = arith.constant 0 : index
    %5 = vector.load %arg2[%c0_7, %c0_8, %c0_9] : memref<2x4x16xf32, #tpu.memory_space<vmem>>, vector<1x4x16xf32>
    %6 = vector.shape_cast %5 : vector<1x4x16xf32> to vector<4x16xf32>
    %cst_10 = arith.constant dense<0.000000e+00> : vector<4x16xf32>
    %7 = tpu.matmul %0, %6, %cst_10 {dimension_numbers = #tpu.dot_dimension_numbers<[1], [0], [0], [1], [0, 0, 1, 1], [], []>} : vector<4x4xf32>, vector<4x16xf32>, vector<4x16xf32> -> vector<4x16xf32>
    %8 = vector.broadcast %2 : vector<4x1xf32> to vector<4x16xf32>
    %9 = arith.addf %7, %8 : vector<4x16xf32>
    %cst_11 = arith.constant dense<0.000000e+00> : vector<4x16xf32>
    %10 = tpu.matmul %1, %6, %cst_11 {dimension_numbers = #tpu.dot_dimension_numbers<[1], [0], [0], [1], [0, 0, 1, 1], [], []>} : vector<4x4xf32>, vector<4x16xf32>, vector<4x16xf32> -> vector<4x16xf32>
    %11 = vector.broadcast %3 : vector<4x1xf32> to vector<4x16xf32>
    %12 = arith.addf %10, %11 : vector<4x16xf32>
    %cst_12 = arith.constant dense<0.000000e+00> : vector<16x16xf32>
    %13 = tpu.matmul %9, %12, %cst_12 {dimension_numbers = #tpu.dot_dimension_numbers<[0], [0], [1], [1], [0, 1, 1, 1], [], []>} : vector<4x16xf32>, vector<4x16xf32>, vector<16x16xf32> -> vector<16x16xf32>
    %14 = arith.addf %4, %13 : vector<16x16xf32>
    %c1 = arith.constant 1 : index
    %c0_13 = arith.constant 0 : index
    %c0_14 = arith.constant 0 : index
    %15 = vector.load %arg2[%c1, %c0_13, %c0_14] : memref<2x4x16xf32, #tpu.memory_space<vmem>>, vector<1x4x16xf32>
    %16 = vector.shape_cast %15 : vector<1x4x16xf32> to vector<4x16xf32>
    %cst_15 = arith.constant dense<0.000000e+00> : vector<4x16xf32>
    %17 = tpu.matmul %0, %16, %cst_15 {dimension_numbers = #tpu.dot_dimension_numbers<[1], [0], [0], [1], [0, 0, 1, 1], [], []>} : vector<4x4xf32>, vector<4x16xf32>, vector<4x16xf32> -> vector<4x16xf32>
    %18 = vector.broadcast %2 : vector<4x1xf32> to vector<4x16xf32>
    %19 = arith.addf %17, %18 : vector<4x16xf32>
    %cst_16 = arith.constant dense<0.000000e+00> : vector<4x16xf32>
    %20 = tpu.matmul %1, %16, %cst_16 {dimension_numbers = #tpu.dot_dimension_numbers<[1], [0], [0], [1], [0, 0, 1, 1], [], []>} : vector<4x4xf32>, vector<4x16xf32>, vector<4x16xf32> -> vector<4x16xf32>
    %21 = vector.broadcast %3 : vector<4x1xf32> to vector<4x16xf32>
    %22 = arith.addf %20, %21 : vector<4x16xf32>
    %cst_17 = arith.constant dense<0.000000e+00> : vector<16x16xf32>
    %23 = tpu.matmul %19, %22, %cst_17 {dimension_numbers = #tpu.dot_dimension_numbers<[0], [0], [1], [1], [0, 1, 1, 1], [], []>} : vector<4x16xf32>, vector<4x16xf32>, vector<16x16xf32> -> vector<16x16xf32>
    %24 = arith.addf %14, %23 : vector<16x16xf32>
    %cst_18 = arith.constant dense<0xFF800000> : vector<16xf32>
    %25 = vector.multi_reduction <maximumf>, %24, %cst_18 [1] : vector<16x16xf32> to vector<16xf32>
    %26 = vector.shape_cast %25 : vector<16xf32> to vector<16x1xf32>
    %27 = vector.broadcast %26 : vector<16x1xf32> to vector<16x16xf32>
    %28 = arith.subf %24, %27 : vector<16x16xf32>
    %29 = math.exp %28 : vector<16x16xf32>
    %cst_19 = arith.constant dense<0.000000e+00> : vector<16xf32>
    %30 = vector.multi_reduction <add>, %29, %cst_19 [1] : vector<16x16xf32> to vector<16xf32>
    %31 = vector.shape_cast %30 : vector<16xf32> to vector<16x1xf32>
    %32 = tpu.reciprocal %31 : vector<16x1xf32> -> vector<16x1xf32>
    %c0_20 = arith.constant 0 : index
    %c0_21 = arith.constant 0 : index
    %33 = memref.load %arg1[%c0_20, %c0_21] : memref<1x1xf32, #tpu.memory_space<smem>>
    %34 = vector.broadcast %33 : f32 to vector<16x16xf32>
    %35 = arith.mulf %34, %29 : vector<16x16xf32>
    %36 = vector.broadcast %32 : vector<16x1xf32> to vector<16x16xf32>
    %37 = arith.mulf %35, %36 : vector<16x16xf32>
    %c0_22 = arith.constant 0 : index
    %c0_23 = arith.constant 0 : index
    %38 = vector.load %arg7[%c0_22, %c0_23] : memref<16x16xf32, #tpu.memory_space<vmem>>, vector<16x16xf32>
    tpu.vector_store %arg7[%c0_22, %c0_23], %37 {strides = array<i32>} : memref<16x16xf32, #tpu.memory_space<vmem>>, vector<16x16xf32>,
    return
  }
  func.func @transform_0(%arg0: i32) -> (i32, i32) {
    %c0_i32 = arith.constant 0 : i32
    %c0_i32_0 = arith.constant 0 : i32
    %c0_i32_1 = arith.constant 0 : i32
    return %c0_i32, %c0_i32_0 : i32, i32
  }
  func.func @transform_1(%arg0: i32) -> (i32, i32, i32) {
    %c0_i32 = arith.constant 0 : i32
    %c0_i32_0 = arith.constant 0 : i32
    %c0_i32_1 = arith.constant 0 : i32
    %c0_i32_2 = arith.constant 0 : i32
    return %c0_i32, %c0_i32_0, %c0_i32_1 : i32, i32, i32
  }
  func.func @transform_2(%arg0: i32) -> (i32, i32) {
    %c0_i32 = arith.constant 0 : i32
    %c0_i32_0 = arith.constant 0 : i32
    %c0_i32_1 = arith.constant 0 : i32
    return %c0_i32, %c0_i32_0 : i32, i32
  }
  func.func @transform_3(%arg0: i32) -> (i32, i32) {
    %c0_i32 = arith.constant 0 : i32
    %c0_i32_0 = arith.constant 0 : i32
    %c0_i32_1 = arith.constant 0 : i32
    return %c0_i32, %c0_i32_0 : i32, i32
  }
  func.func @transform_4(%arg0: i32) -> (i32, i32) {
    %c0_i32 = arith.constant 0 : i32
    %c0_i32_0 = arith.constant 0 : i32
    %c0_i32_1 = arith.constant 0 : i32
    return %c0_i32, %c0_i32_0 : i32, i32
  }
  func.func @transform_5(%arg0: i32) -> (i32, i32) {
    %c0_i32 = arith.constant 0 : i32
    %c0_i32_0 = arith.constant 0 : i32
    %c0_i32_1 = arith.constant 0 : i32
    return %c0_i32, %c0_i32_0 : i32, i32
  }
  func.func @transform_6(%arg0: i32) -> (i32, i32) {
    %c0_i32 = arith.constant 0 : i32
    %c0_i32_0 = arith.constant 0 : i32
    %c0_i32_1 = arith.constant 0 : i32
    return %c0_i32, %c0_i32_0 : i32, i32
  }
}

</mosaic_0001>

<llo_original>
// kernel: tpu_custom_call.1
$region0: #{tpu_custom_call.1}
  #allocation0 [shape = 'u32[]', space=smem, size = 0x4, offset = 0x4, fixed_abs, tag = 'smem constant byte address 0x4 - core index']
  #allocation1 [shape = 'u32[144,128]{1,0:T(1,128)}', space=vmem, size = 0x12000, scoped, tag = 'internal scratch']
  #allocation2 [shape = 'f32[1,1]{1,0:T(1,128)S(6)}', space=smem, size = 0x200, scoped, tag = 'scoped memory for tpu_custom_call.1']
  %s0 = inlined_call_operand.<no memory space> [shape: f32[1,1], index: 0, kind: input, shape index: {}]
  %s1 = inlined_call_operand.vmem [shape: f32[2,4,16], index: 1, kind: input, shape index: {}]
  %s2 = inlined_call_operand.vmem [shape: f32[4,4], index: 2, kind: input, shape index: {}]
  %s3 = inlined_call_operand.vmem [shape: f32[4,4], index: 3, kind: input, shape index: {}]
  %s4 = inlined_call_operand.vmem [shape: f32[4,1], index: 4, kind: input, shape index: {}]
  %s5 = inlined_call_operand.vmem [shape: f32[4,1], index: 5, kind: input, shape index: {}]
  %s6 = inlined_call_operand.hbm [shape: f32[16,16], index: 6, kind: output, shape index: {}]
  %s7 = sld [smem:[#allocation0]]
  $region34: #{tpu_custom_call.1} parent=0
    _
  %s9 = ssub.s32 1, %s7
  %s10 = scalar_select 0, %s9, %s7
  %11 = sst [smem:[#allocation2]] %s0
  $region1: #{tpu_custom_call.1} parent=0
    #allocation3 [shape = 'u8[8192]{0}', space=vmem, size = 0x2000, scoped, tag = 'output window, operand 0, single buffered']
    #allocation4 [shape = 's32[1]{0}', space=sflag, size = 0x4, scoped, tag = 'scoped memory for tpu_custom_call.1']
    %12 = vsyncpa [#allocation4], 0
    // Predicated region
    $region2: #{tpu_custom_call.1} parent=1 // pred_check
      _
    $region3: #{tpu_custom_call.1} parent=1 // pred_check_branch
      %14 = sbr.rel (0) target = $region5
    $region4: #{tpu_custom_call.1} parent=1 // pred_region
      _
    $region5: #{tpu_custom_call.1} parent=1 // pred_fallthru
      _
    // Predicated region
    $region6: #{tpu_custom_call.1} parent=1 // pred_check
      _
    $region7: #{tpu_custom_call.1} parent=1 // pred_check_branch
      %16 = sbr.rel (0) target = $region9
    $region8: #{tpu_custom_call.1} parent=1 // pred_region
      _
    $region9: #{tpu_custom_call.1} parent=1 // pred_fallthru
      _
    // Predicated region
    $region10: #{tpu_custom_call.1} parent=1 // pred_check
      _
    $region11: #{tpu_custom_call.1} parent=1 // pred_check_branch
      %18 = sbr.rel (0) target = $region13
    $region12: #{tpu_custom_call.1} parent=1 // pred_region
      _
    $region13: #{tpu_custom_call.1} parent=1 // pred_fallthru
      _
    // Predicated region
    $region14: #{tpu_custom_call.1} parent=1 // pred_check
      _
    $region15: #{tpu_custom_call.1} parent=1 // pred_check_branch
      %20 = sbr.rel (0) target = $region17
    $region16: #{tpu_custom_call.1} parent=1 // pred_region
      _
    $region17: #{tpu_custom_call.1} parent=1 // pred_fallthru
      _
    // Predicated region
    $region18: #{tpu_custom_call.1} parent=1 // pred_check
      _
    $region19: #{tpu_custom_call.1} parent=1 // pred_check_branch
      %22 = sbr.rel (0) target = $region21
    $region20: #{tpu_custom_call.1} parent=1 // pred_region
      _
    $region21: #{tpu_custom_call.1} parent=1 // pred_fallthru
      _
    // Predicated region
    $region22: #{tpu_custom_call.1} parent=1 // pred_check
      _
    $region23: #{tpu_custom_call.1} parent=1 // pred_check_branch
      %24 = sbr.rel (0) target = $region25
    $region24: #{tpu_custom_call.1} parent=1 // pred_region
      _
    $region25: #{tpu_custom_call.1} parent=1 // pred_fallthru
      _
    %v25 = vld [vmem:[%s2] sm:$0xf]
    %v26 = vld [vmem:[%s3] sm:$0xf]
    %v27 = vld [vmem:[%s4] sm:$0xf]
    %v28 = vld [vmem:[%s5] sm:$0xf]
    %v29 = vld [vmem:[%s1] sm:$0xf]
    %31 = vset.pattern.permute.xlu0 0
    %32 = vperm.xlu0 %31, %v27
    %v33 = vpop.permute.xlu0 %32
    %vm35 = vcmask 31744
    %v37 = vsel %vm35, %v25, 0
    %vm39 = vcmask 1043456
    %v41 = vsel %vm39, %v29, 0
    %43 = vmatprep.subr.mxu0 0.0
    %44 = vmatpush1.msra.mxu0 %v41
    %45 = vmatprep.subr.mxu0 0.0
    %46 = vmatpush1.msra.mxu0 0.0
    %47 = vmatprep.subr.mxu0 0.0
    %48 = vmatpush1.msra.mxu0 0.0
    %49 = vmatprep.subr.mxu0 0.0
    %50 = vmatpush1.msra.mxu0 0.0
    %51 = vmatprep.subr.mxu0 0.0
    %52 = vmatpush1.msra.mxu0 0.0
    %53 = vmatprep.subr.mxu0 0.0
    %54 = vmatpush1.msra.mxu0 0.0
    %55 = vmatprep.subr.mxu0 0.0
    %56 = vmatpush1.msra.mxu0 0.0
    %57 = vmatprep.subr.mxu0 0.0
    %58 = vmatpush1.msra.mxu0 0.0
    %59 = vmatprep.subr.mxu0 0.0
    %60 = vmatpush1.msra.mxu0 0.0
    %61 = vmatprep.subr.mxu0 0.0
    %62 = vmatpush1.msra.mxu0 0.0
    %63 = vmatprep.subr.mxu0 0.0
    %64 = vmatpush1.msra.mxu0 0.0
    %65 = vmatprep.subr.mxu0 0.0
    %66 = vmatpush1.msra.mxu0 0.0
    %67 = vmatprep.subr.mxu0 0.0
    %68 = vmatpush1.msra.mxu0 0.0
    %69 = vmatprep.subr.mxu0 0.0
    %70 = vmatpush1.msra.mxu0 0.0
    %71 = vmatprep.subr.mxu0 0.0
    %72 = vmatpush1.msra.mxu0 0.0
    %73 = vmatprep.subr.mxu0 0.0
    %74 = vmatpush1.msra.mxu0 0.0
    %75 = vmatprep.subr.mxu0 0.0
    %76 = vmatpush1.msra.mxu0 0.0
    %77 = vmatprep.subr.mxu0 0.0
    %78 = vmatpush1.msra.mxu0 0.0
    %79 = vmatprep.subr.mxu0 0.0
    %80 = vmatpush1.msra.mxu0 0.0
    %81 = vmatprep.subr.mxu0 0.0
    %82 = vmatpush1.msra.mxu0 0.0
    %83 = vmatprep.subr.mxu0 0.0
    %84 = vmatpush1.msra.mxu0 0.0
    %85 = vmatprep.subr.mxu0 0.0
    %86 = vmatpush1.msra.mxu0 0.0
    %87 = vmatprep.subr.mxu0 0.0
    %88 = vmatpush1.msra.mxu0 0.0
    %89 = vmatprep.subr.mxu0 0.0
    %90 = vmatpush1.msra.mxu0 0.0
    %91 = vmatprep.subr.mxu0 0.0
    %92 = vmatpush1.msra.mxu0 0.0
    %93 = vmatprep.subr.mxu0 0.0
    %94 = vmatpush1.msra.mxu0 0.0
    %95 = vmatprep.subr.mxu0 0.0
    %96 = vmatpush1.msra.mxu0 0.0
    %97 = vmatprep.subr.mxu0 0.0
    %98 = vmatpush1.msra.mxu0 0.0
    %99 = vmatprep.subr.mxu0 0.0
    %100 = vmatpush1.msra.mxu0 0.0
    %101 = vmatprep.subr.mxu0 0.0
    %102 = vmatpush1.msra.mxu0 0.0
    %103 = vmatprep.subr.mxu0 0.0
    %104 = vmatpush1.msra.mxu0 0.0
    %105 = vmatprep.subr.mxu0 0.0
    %106 = vmatpush1.msra.mxu0 0.0
    %107 = vmatprep.mubr.f32.mxu0 0.0
    %108 = vmatmul.mubr.f32.gmra.mrb[0].mxu0 %v37
    %v109 = vpop.f32.mrb[0].mxu0
    %v110 = vadd.f32 %v33, %v109
    %v111 = vpop.f32.mrb[0].mxu0
    %112 = vdwg.mxu0
    %114 = vset.pattern.permute.xlu0 0
    %115 = vperm.xlu0 %114, %v28
    %v116 = vpop.permute.xlu0 %115
    %v119 = vsel %vm35, %v26, 0
    %121 = vmatprep.subr.mxu0 0.0
    %122 = vmatpush1.msra.mxu0 %v41
    %123 = vmatprep.subr.mxu0 0.0
    %124 = vmatpush1.msra.mxu0 0.0
    %125 = vmatprep.subr.mxu0 0.0
    %126 = vmatpush1.msra.mxu0 0.0
    %127 = vmatprep.subr.mxu0 0.0
    %128 = vmatpush1.msra.mxu0 0.0
    %129 = vmatprep.subr.mxu0 0.0
    %130 = vmatpush1.msra.mxu0 0.0
    %131 = vmatprep.subr.mxu0 0.0
    %132 = vmatpush1.msra.mxu0 0.0
    %133 = vmatprep.subr.mxu0 0.0
    %134 = vmatpush1.msra.mxu0 0.0
    %135 = vmatprep.subr.mxu0 0.0
    %136 = vmatpush1.msra.mxu0 0.0
    %137 = vmatprep.subr.mxu0 0.0
    %138 = vmatpush1.msra.mxu0 0.0
    %139 = vmatprep.subr.mxu0 0.0
    %140 = vmatpush1.msra.mxu0 0.0
    %141 = vmatprep.subr.mxu0 0.0
    %142 = vmatpush1.msra.mxu0 0.0
    %143 = vmatprep.subr.mxu0 0.0
    %144 = vmatpush1.msra.mxu0 0.0
    %145 = vmatprep.subr.mxu0 0.0
    %146 = vmatpush1.msra.mxu0 0.0
    %147 = vmatprep.subr.mxu0 0.0
    %148 = vmatpush1.msra.mxu0 0.0
    %149 = vmatprep.subr.mxu0 0.0
    %150 = vmatpush1.msra.mxu0 0.0
    %151 = vmatprep.subr.mxu0 0.0
    %152 = vmatpush1.msra.mxu0 0.0
    %153 = vmatprep.subr.mxu0 0.0
    %154 = vmatpush1.msra.mxu0 0.0
    %155 = vmatprep.subr.mxu0 0.0
    %156 = vmatpush1.msra.mxu0 0.0
    %157 = vmatprep.subr.mxu0 0.0
    %158 = vmatpush1.msra.mxu0 0.0
    %159 = vmatprep.subr.mxu0 0.0
    %160 = vmatpush1.msra.mxu0 0.0
    %161 = vmatprep.subr.mxu0 0.0
    %162 = vmatpush1.msra.mxu0 0.0
    %163 = vmatprep.subr.mxu0 0.0
    %164 = vmatpush1.msra.mxu0 0.0
    %165 = vmatprep.subr.mxu0 0.0
    %166 = vmatpush1.msra.mxu0 0.0
    %167 = vmatprep.subr.mxu0 0.0
    %168 = vmatpush1.msra.mxu0 0.0
    %169 = vmatprep.subr.mxu0 0.0
    %170 = vmatpush1.msra.mxu0 0.0
    %171 = vmatprep.subr.mxu0 0.0
    %172 = vmatpush1.msra.mxu0 0.0
    %173 = vmatprep.subr.mxu0 0.0
    %174 = vmatpush1.msra.mxu0 0.0
    %175 = vmatprep.subr.mxu0 0.0
    %176 = vmatpush1.msra.mxu0 0.0
    %177 = vmatprep.subr.mxu0 0.0
    %178 = vmatpush1.msra.mxu0 0.0
    %179 = vmatprep.subr.mxu0 0.0
    %180 = vmatpush1.msra.mxu0 0.0
    %181 = vmatprep.subr.mxu0 0.0
    %182 = vmatpush1.msra.mxu0 0.0
    %183 = vmatprep.subr.mxu0 0.0
    %184 = vmatpush1.msra.mxu0 0.0
    %185 = vmatprep.mubr.f32.mxu0 0.0
    %186 = vmatmul.mubr.f32.gmra.mrb[0].mxu0 %v119
    %v187 = vpop.f32.mrb[0].mxu0
    %v188 = vadd.f32 %v116, %v187
    %v189 = vpop.f32.mrb[0].mxu0
    %190 = vdwg.mxu0
    %s191 = scalar_lea.vmem %s1, 4
    %v192 = vld [vmem:[%s191] sm:$0xf]
    %v194 = vsel %vm39, %v192, 0
    %196 = vmatprep.subr.mxu0 0.0
    %197 = vmatpush1.msra.mxu0 %v194
    %198 = vmatprep.subr.mxu0 0.0
    %199 = vmatpush1.msra.mxu0 0.0
    %200 = vmatprep.subr.mxu0 0.0
    %201 = vmatpush1.msra.mxu0 0.0
    %202 = vmatprep.subr.mxu0 0.0
    %203 = vmatpush1.msra.mxu0 0.0
    %204 = vmatprep.subr.mxu0 0.0
    %205 = vmatpush1.msra.mxu0 0.0
    %206 = vmatprep.subr.mxu0 0.0
    %207 = vmatpush1.msra.mxu0 0.0
    %208 = vmatprep.subr.mxu0 0.0
    %209 = vmatpush1.msra.mxu0 0.0
    %210 = vmatprep.subr.mxu0 0.0
    %211 = vmatpush1.msra.mxu0 0.0
    %212 = vmatprep.subr.mxu0 0.0
    %213 = vmatpush1.msra.mxu0 0.0
    %214 = vmatprep.subr.mxu0 0.0
    %215 = vmatpush1.msra.mxu0 0.0
    %216 = vmatprep.subr.mxu0 0.0
    %217 = vmatpush1.msra.mxu0 0.0
    %218 = vmatprep.subr.mxu0 0.0
    %219 = vmatpush1.msra.mxu0 0.0
    %220 = vmatprep.subr.mxu0 0.0
    %221 = vmatpush1.msra.mxu0 0.0
    %222 = vmatprep.subr.mxu0 0.0
    %223 = vmatpush1.msra.mxu0 0.0
    %224 = vmatprep.subr.mxu0 0.0
    %225 = vmatpush1.msra.mxu0 0.0
    %226 = vmatprep.subr.mxu0 0.0
    %227 = vmatpush1.msra.mxu0 0.0
    %228 = vmatprep.subr.mxu0 0.0
    %229 = vmatpush1.msra.mxu0 0.0
    %230 = vmatprep.subr.mxu0 0.0
    %231 = vmatpush1.msra.mxu0 0.0
    %232 = vmatprep.subr.mxu0 0.0
    %233 = vmatpush1.msra.mxu0 0.0
    %234 = vmatprep.subr.mxu0 0.0
    %235 = vmatpush1.msra.mxu0 0.0
    %236 = vmatprep.subr.mxu0 0.0
    %237 = vmatpush1.msra.mxu0 0.0
    %238 = vmatprep.subr.mxu0 0.0
    %239 = vmatpush1.msra.mxu0 0.0
    %240 = vmatprep.subr.mxu0 0.0
    %241 = vmatpush1.msra.mxu0 0.0
    %242 = vmatprep.subr.mxu0 0.0
    %243 = vmatpush1.msra.mxu0 0.0
    %244 = vmatprep.subr.mxu0 0.0
    %245 = vmatpush1.msra.mxu0 0.0
    %246 = vmatprep.subr.mxu0 0.0
    %247 = vmatpush1.msra.mxu0 0.0
    %248 = vmatprep.subr.mxu0 0.0
    %249 = vmatpush1.msra.mxu0 0.0
    %250 = vmatprep.subr.mxu0 0.0
    %251 = vmatpush1.msra.mxu0 0.0
    %252 = vmatprep.subr.mxu0 0.0
    %253 = vmatpush1.msra.mxu0 0.0
    %254 = vmatprep.subr.mxu0 0.0
    %255 = vmatpush1.msra.mxu0 0.0
    %256 = vmatprep.subr.mxu0 0.0
    %257 = vmatpush1.msra.mxu0 0.0
    %258 = vmatprep.subr.mxu0 0.0
    %259 = vmatpush1.msra.mxu0 0.0
    %260 = vmatprep.mubr.f32.mxu0 0.0
    %261 = vmatmul.mubr.f32.gmra.mrb[0].mxu0 %v37
    %v262 = vpop.f32.mrb[0].mxu0
    %v263 = vadd.f32 %v33, %v262
    %v264 = vpop.f32.mrb[0].mxu0
    %265 = vdwg.mxu0
    %266 = vmatprep.subr.mxu0 0.0
    %267 = vmatpush1.msra.mxu0 %v194
    %268 = vmatprep.subr.mxu0 0.0
    %269 = vmatpush1.msra.mxu0 0.0
    %270 = vmatprep.subr.mxu0 0.0
    %271 = vmatpush1.msra.mxu0 0.0
    %272 = vmatprep.subr.mxu0 0.0
    %273 = vmatpush1.msra.mxu0 0.0
    %274 = vmatprep.subr.mxu0 0.0
    %275 = vmatpush1.msra.mxu0 0.0
    %276 = vmatprep.subr.mxu0 0.0
    %277 = vmatpush1.msra.mxu0 0.0
    %278 = vmatprep.subr.mxu0 0.0
    %279 = vmatpush1.msra.mxu0 0.0
    %280 = vmatprep.subr.mxu0 0.0
    %281 = vmatpush1.msra.mxu0 0.0
    %282 = vmatprep.subr.mxu0 0.0
    %283 = vmatpush1.msra.mxu0 0.0
    %284 = vmatprep.subr.mxu0 0.0
    %285 = vmatpush1.msra.mxu0 0.0
    %286 = vmatprep.subr.mxu0 0.0
    %287 = vmatpush1.msra.mxu0 0.0
    %288 = vmatprep.subr.mxu0 0.0
    %289 = vmatpush1.msra.mxu0 0.0
    %290 = vmatprep.subr.mxu0 0.0
    %291 = vmatpush1.msra.mxu0 0.0
    %292 = vmatprep.subr.mxu0 0.0
    %293 = vmatpush1.msra.mxu0 0.0
    %294 = vmatprep.subr.mxu0 0.0
    %295 = vmatpush1.msra.mxu0 0.0
    %296 = vmatprep.subr.mxu0 0.0
    %297 = vmatpush1.msra.mxu0 0.0
    %298 = vmatprep.subr.mxu0 0.0
    %299 = vmatpush1.msra.mxu0 0.0
    %300 = vmatprep.subr.mxu0 0.0
    %301 = vmatpush1.msra.mxu0 0.0
    %302 = vmatprep.subr.mxu0 0.0
    %303 = vmatpush1.msra.mxu0 0.0
    %304 = vmatprep.subr.mxu0 0.0
    %305 = vmatpush1.msra.mxu0 0.0
    %306 = vmatprep.subr.mxu0 0.0
    %307 = vmatpush1.msra.mxu0 0.0
    %308 = vmatprep.subr.mxu0 0.0
    %309 = vmatpush1.msra.mxu0 0.0
    %310 = vmatprep.subr.mxu0 0.0
    %311 = vmatpush1.msra.mxu0 0.0
    %312 = vmatprep.subr.mxu0 0.0
    %313 = vmatpush1.msra.mxu0 0.0
    %314 = vmatprep.subr.mxu0 0.0
    %315 = vmatpush1.msra.mxu0 0.0
    %316 = vmatprep.subr.mxu0 0.0
    %317 = vmatpush1.msra.mxu0 0.0
    %318 = vmatprep.subr.mxu0 0.0
    %319 = vmatpush1.msra.mxu0 0.0
    %320 = vmatprep.subr.mxu0 0.0
    %321 = vmatpush1.msra.mxu0 0.0
    %322 = vmatprep.subr.mxu0 0.0
    %323 = vmatpush1.msra.mxu0 0.0
    %324 = vmatprep.subr.mxu0 0.0
    %325 = vmatpush1.msra.mxu0 0.0
    %326 = vmatprep.subr.mxu0 0.0
    %327 = vmatpush1.msra.mxu0 0.0
    %328 = vmatprep.subr.mxu0 0.0
    %329 = vmatpush1.msra.mxu0 0.0
    %330 = vmatprep.mubr.f32.mxu0 0.0
    %331 = vmatmul.mubr.f32.gmra.mrb[0].mxu0 %v119
    %v332 = vpop.f32.mrb[0].mxu0
    %v333 = vadd.f32 %v116, %v332
    %v334 = vpop.f32.mrb[0].mxu0
    %335 = vdwg.mxu0
    %336 = vxpose.xlu0.b32.start [1/16] %v263, 128
    %337 = vxpose.xlu0.b32.cont [2/16] 0.0, 128
    %338 = vxpose.xlu0.b32.cont [3/16] 0.0, 128
    %339 = vxpose.xlu0.b32.cont [4/16] 0.0, 128
    %340 = vxpose.xlu0.b32.cont [5/16] 0.0, 128
    %341 = vxpose.xlu0.b32.cont [6/16] 0.0, 128
    %342 = vxpose.xlu0.b32.cont [7/16] 0.0, 128
    %343 = vxpose.xlu0.b32.cont [8/16] 0.0, 128
    %344 = vxpose.xlu0.b32.cont [9/16] 0.0, 128
    %345 = vxpose.xlu0.b32.cont [10/16] 0.0, 128
    %346 = vxpose.xlu0.b32.cont [11/16] 0.0, 128
    %347 = vxpose.xlu0.b32.cont [12/16] 0.0, 128
    %348 = vxpose.xlu0.b32.cont [13/16] 0.0, 128
    %349 = vxpose.xlu0.b32.cont [14/16] 0.0, 128
    %350 = vxpose.xlu0.b32.cont [15/16] 0.0, 128
    %351 = vxpose.xlu0.b32.end [16/16] 0.0, 128
    %v352 = vpop.trf.xlu0
    %v353 = vpop.trf.xlu0
    %v354 = vpop.trf.xlu0
    %v355 = vpop.trf.xlu0
    %v356 = vpop.trf.xlu0
    %v357 = vpop.trf.xlu0
    %v358 = vpop.trf.xlu0
    %v359 = vpop.trf.xlu0
    %v360 = vpop.trf.xlu0
    %v361 = vpop.trf.xlu0
    %v362 = vpop.trf.xlu0
    %v363 = vpop.trf.xlu0
    %v364 = vpop.trf.xlu0
    %v365 = vpop.trf.xlu0
    %v366 = vpop.trf.xlu0
    %v367 = vpop.trf.xlu0
    %v369 = vsel %vm35, %v352, 0
    %v372 = vsel %vm35, %v353, 0
    %v375 = vsel %vm39, %v333, 0
    %377 = vmatprep.subr.mxu0 0.0
    %378 = vmatpush1.msra.mxu0 %v375
    %379 = vmatprep.subr.mxu0 0.0
    %380 = vmatpush1.msra.mxu0 0.0
    %381 = vmatprep.subr.mxu0 0.0
    %382 = vmatpush1.msra.mxu0 0.0
    %383 = vmatprep.subr.mxu0 0.0
    %384 = vmatpush1.msra.mxu0 0.0
    %385 = vmatprep.subr.mxu0 0.0
    %386 = vmatpush1.msra.mxu0 0.0
    %387 = vmatprep.subr.mxu0 0.0
    %388 = vmatpush1.msra.mxu0 0.0
    %389 = vmatprep.subr.mxu0 0.0
    %390 = vmatpush1.msra.mxu0 0.0
    %391 = vmatprep.subr.mxu0 0.0
    %392 = vmatpush1.msra.mxu0 0.0
    %393 = vmatprep.subr.mxu0 0.0
    %394 = vmatpush1.msra.mxu0 0.0
    %395 = vmatprep.subr.mxu0 0.0
    %396 = vmatpush1.msra.mxu0 0.0
    %397 = vmatprep.subr.mxu0 0.0
    %398 = vmatpush1.msra.mxu0 0.0
    %399 = vmatprep.subr.mxu0 0.0
    %400 = vmatpush1.msra.mxu0 0.0
    %401 = vmatprep.subr.mxu0 0.0
    %402 = vmatpush1.msra.mxu0 0.0
    %403 = vmatprep.subr.mxu0 0.0
    %404 = vmatpush1.msra.mxu0 0.0
    %405 = vmatprep.subr.mxu0 0.0
    %406 = vmatpush1.msra.mxu0 0.0
    %407 = vmatprep.subr.mxu0 0.0
    %408 = vmatpush1.msra.mxu0 0.0
    %409 = vmatprep.subr.mxu0 0.0
    %410 = vmatpush1.msra.mxu0 0.0
    %411 = vmatprep.subr.mxu0 0.0
    %412 = vmatpush1.msra.mxu0 0.0
    %413 = vmatprep.subr.mxu0 0.0
    %414 = vmatpush1.msra.mxu0 0.0
    %415 = vmatprep.subr.mxu0 0.0
    %416 = vmatpush1.msra.mxu0 0.0
    %417 = vmatprep.subr.mxu0 0.0
    %418 = vmatpush1.msra.mxu0 0.0
    %419 = vmatprep.subr.mxu0 0.0
    %420 = vmatpush1.msra.mxu0 0.0
    %421 = vmatprep.subr.mxu0 0.0
    %422 = vmatpush1.msra.mxu0 0.0
    %423 = vmatprep.subr.mxu0 0.0
    %424 = vmatpush1.msra.mxu0 0.0
    %425 = vmatprep.subr.mxu0 0.0
    %426 = vmatpush1.msra.mxu0 0.0
    %427 = vmatprep.subr.mxu0 0.0
    %428 = vmatpush1.msra.mxu0 0.0
    %429 = vmatprep.subr.mxu0 0.0
    %430 = vmatpush1.msra.mxu0 0.0
    %431 = vmatprep.subr.mxu0 0.0
    %432 = vmatpush1.msra.mxu0 0.0
    %433 = vmatprep.subr.mxu0 0.0
    %434 = vmatpush1.msra.mxu0 0.0
    %435 = vmatprep.subr.mxu0 0.0
    %436 = vmatpush1.msra.mxu0 0.0
    %437 = vmatprep.subr.mxu0 0.0
    %438 = vmatpush1.msra.mxu0 0.0
    %439 = vmatprep.subr.mxu0 0.0
    %440 = vmatpush1.msra.mxu0 0.0
    %441 = vmatprep.mubr.f32.mxu0 0.0
    %442 = vmatmul.mubr.f32.gmra.mrb[0].mxu0 %v369
    %v443 = vpop.f32.mrb[0].mxu0
    %v444 = vadd.f32 0.0, %v443
    %v445 = vpop.f32.mrb[0].mxu0
    %446 = vmatprep.mubr.f32.mxu0 0.0
    %447 = vmatmul.mubr.f32.gmra.mrb[0].mxu0 %v372
    %v448 = vpop.f32.mrb[0].mxu0
    %v449 = vadd.f32 0.0, %v448
    %v450 = vpop.f32.mrb[0].mxu0
    %451 = vdwg.mxu0
    %452 = vxpose.xlu0.b32.start [1/16] %v110, 128
    %453 = vxpose.xlu0.b32.cont [2/16] 0.0, 128
    %454 = vxpose.xlu0.b32.cont [3/16] 0.0, 128
    %455 = vxpose.xlu0.b32.cont [4/16] 0.0, 128
    %456 = vxpose.xlu0.b32.cont [5/16] 0.0, 128
    %457 = vxpose.xlu0.b32.cont [6/16] 0.0, 128
    %458 = vxpose.xlu0.b32.cont [7/16] 0.0, 128
    %459 = vxpose.xlu0.b32.cont [8/16] 0.0, 128
    %460 = vxpose.xlu0.b32.cont [9/16] 0.0, 128
    %461 = vxpose.xlu0.b32.cont [10/16] 0.0, 128
    %462 = vxpose.xlu0.b32.cont [11/16] 0.0, 128
    %463 = vxpose.xlu0.b32.cont [12/16] 0.0, 128
    %464 = vxpose.xlu0.b32.cont [13/16] 0.0, 128
    %465 = vxpose.xlu0.b32.cont [14/16] 0.0, 128
    %466 = vxpose.xlu0.b32.cont [15/16] 0.0, 128
    %467 = vxpose.xlu0.b32.end [16/16] 0.0, 128
    %v468 = vpop.trf.xlu0
    %v469 = vpop.trf.xlu0
    %v470 = vpop.trf.xlu0
    %v471 = vpop.trf.xlu0
    %v472 = vpop.trf.xlu0
    %v473 = vpop.trf.xlu0
    %v474 = vpop.trf.xlu0
    %v475 = vpop.trf.xlu0
    %v476 = vpop.trf.xlu0
    %v477 = vpop.trf.xlu0
    %v478 = vpop.trf.xlu0
    %v479 = vpop.trf.xlu0
    %v480 = vpop.trf.xlu0
    %v481 = vpop.trf.xlu0
    %v482 = vpop.trf.xlu0
    %v483 = vpop.trf.xlu0
    %v485 = vsel %vm35, %v468, 0
    %v488 = vsel %vm35, %v469, 0
    %v491 = vsel %vm39, %v188, 0
    %493 = vmatprep.subr.mxu0 0.0
    %494 = vmatpush1.msra.mxu0 %v491
    %495 = vmatprep.subr.mxu0 0.0
    %496 = vmatpush1.msra.mxu0 0.0
    %497 = vmatprep.subr.mxu0 0.0
    %498 = vmatpush1.msra.mxu0 0.0
    %499 = vmatprep.subr.mxu0 0.0
    %500 = vmatpush1.msra.mxu0 0.0
    %501 = vmatprep.subr.mxu0 0.0
    %502 = vmatpush1.msra.mxu0 0.0
    %503 = vmatprep.subr.mxu0 0.0
    %504 = vmatpush1.msra.mxu0 0.0
    %505 = vmatprep.subr.mxu0 0.0
    %506 = vmatpush1.msra.mxu0 0.0
    %507 = vmatprep.subr.mxu0 0.0
    %508 = vmatpush1.msra.mxu0 0.0
    %509 = vmatprep.subr.mxu0 0.0
    %510 = vmatpush1.msra.mxu0 0.0
    %511 = vmatprep.subr.mxu0 0.0
    %512 = vmatpush1.msra.mxu0 0.0
    %513 = vmatprep.subr.mxu0 0.0
    %514 = vmatpush1.msra.mxu0 0.0
    %515 = vmatprep.subr.mxu0 0.0
    %516 = vmatpush1.msra.mxu0 0.0
    %517 = vmatprep.subr.mxu0 0.0
    %518 = vmatpush1.msra.mxu0 0.0
    %519 = vmatprep.subr.mxu0 0.0
    %520 = vmatpush1.msra.mxu0 0.0
    %521 = vmatprep.subr.mxu0 0.0
    %522 = vmatpush1.msra.mxu0 0.0
    %523 = vmatprep.subr.mxu0 0.0
    %524 = vmatpush1.msra.mxu0 0.0
    %525 = vmatprep.subr.mxu0 0.0
    %526 = vmatpush1.msra.mxu0 0.0
    %527 = vmatprep.subr.mxu0 0.0
    %528 = vmatpush1.msra.mxu0 0.0
    %529 = vmatprep.subr.mxu0 0.0
    %530 = vmatpush1.msra.mxu0 0.0
    %531 = vmatprep.subr.mxu0 0.0
    %532 = vmatpush1.msra.mxu0 0.0
    %533 = vmatprep.subr.mxu0 0.0
    %534 = vmatpush1.msra.mxu0 0.0
    %535 = vmatprep.subr.mxu0 0.0
    %536 = vmatpush1.msra.mxu0 0.0
    %537 = vmatprep.subr.mxu0 0.0
    %538 = vmatpush1.msra.mxu0 0.0
    %539 = vmatprep.subr.mxu0 0.0
    %540 = vmatpush1.msra.mxu0 0.0
    %541 = vmatprep.subr.mxu0 0.0
    %542 = vmatpush1.msra.mxu0 0.0
    %543 = vmatprep.subr.mxu0 0.0
    %544 = vmatpush1.msra.mxu0 0.0
    %545 = vmatprep.subr.mxu0 0.0
    %546 = vmatpush1.msra.mxu0 0.0
    %547 = vmatprep.subr.mxu0 0.0
    %548 = vmatpush1.msra.mxu0 0.0
    %549 = vmatprep.subr.mxu0 0.0
    %550 = vmatpush1.msra.mxu0 0.0
    %551 = vmatprep.subr.mxu0 0.0
    %552 = vmatpush1.msra.mxu0 0.0
    %553 = vmatprep.subr.mxu0 0.0
    %554 = vmatpush1.msra.mxu0 0.0
    %555 = vmatprep.subr.mxu0 0.0
    %556 = vmatpush1.msra.mxu0 0.0
    %557 = vmatprep.mubr.f32.mxu0 0.0
    %558 = vmatmul.mubr.f32.gmra.mrb[0].mxu0 %v485
    %v559 = vpop.f32.mrb[0].mxu0
    %v560 = vadd.f32 %v444, %v559
    %v561 = vpop.f32.mrb[0].mxu0
    %562 = vmatprep.mubr.f32.mxu0 0.0
    %563 = vmatmul.mubr.f32.gmra.mrb[0].mxu0 %v488
    %v564 = vpop.f32.mrb[0].mxu0
    %v565 = vadd.f32 %v449, %v564
    %v566 = vpop.f32.mrb[0].mxu0
    %567 = vdwg.mxu0
    %vm568 = vcmask 130048
    %v569 = vsel %vm568, %v560, -inf
    %570 = vmax.xlane.f32.xlu0 %v569
    %v571 = vpop.xlane.xlu0 %570
    %v572 = vsel %vm568, %v565, -inf
    %573 = vmax.xlane.f32.xlu0 %v572
    %v574 = vpop.xlane.xlu0 %573
    %v575 = vsub.f32 %v560, %v571
    %v576 = vsub.f32 %v565, %v574
    %v577 = vmul.f32 %v575, 1.442695
    %v578 = vpow.pop %v577
    %v579 = vmul.f32 %v576, 1.442695
    %v580 = vpow.pop %v579
    %v581 = vsel %vm568, %v578, 0.0
    %582 = vadd.xlane.f32.xlu0 %v581
    %v583 = vpop.xlane.xlu0 %582
    %v584 = vsel %vm568, %v580, 0.0
    %585 = vadd.xlane.f32.xlu0 %v584
    %v586 = vpop.xlane.xlu0 %585
    %v587 = vrcp.pop %v583
    %v588 = vrcp.pop %v586
    %s589 = sld [smem:[#allocation2]]
    %v590 = vstv %s589
    %v591 = vmul.f32 %v590, %v578
    %v592 = vmul.f32 %v590, %v580
    %v593 = vmul.f32 %v591, %v587
    %v594 = vmul.f32 %v592, %v588
    %595 = vst.msk [vmem:[#allocation3] sm:$0xff] %vm568, %v593
    %596 = vst.msk [vmem:[#allocation3 + $0x8] sm:$0xff] %vm568, %v594
    // Predicated region
    $region26: #{tpu_custom_call.1} parent=1 // pred_check
      _
    $region27: #{tpu_custom_call.1} parent=1 // pred_check_branch
      %598 = sbr.rel (0) target = $region29
    $region28: #{tpu_custom_call.1} parent=1 // pred_region
      %s600 = ssub.s32 256, 256
      %601 = vsyncadd [#allocation4], %s600
      %s602 = sshll.u32 [#allocation3], 4
      %s603 = int_to_ptr.vmem [resolvable:$true] %s602
      %608 = dma.vmem_to_hbm [thread:$0]  %s603, 256, %s6, [#allocation4], 128, 128, 8
    $region29: #{tpu_custom_call.1} parent=1 // pred_fallthru
      _
    // Predicated region
    $region30: #{tpu_custom_call.1} parent=1 // pred_check
      _
    $region31: #{tpu_custom_call.1} parent=1 // pred_check_branch
      %610 = sbr.rel (0) target = $region33
    $region32: #{tpu_custom_call.1} parent=1 // pred_region
      %611 = dma.done [#allocation4], 256
    $region33: #{tpu_custom_call.1} parent=1 // pred_fallthru
      _
    %612 = vsyncpa [#allocation4], 1

</llo_original>
